<compile_context>
chip_gen: v7x
topology: tpu7x:2x2x1
jax: 0.10.0
libtpu: 0.0.40
codegen_flags: <defaults>
</compile_context>

<pallas_src>
import numpy as np
import jax
import jax.numpy as jnp
from jax import lax
from jax.experimental import pallas as pl
from jax.experimental.pallas import tpu as pltpu

# Single-block padded tile sizes (block == full array).
M_PAD = 8      # >= N*OH*OW (= 1)  : one sublane tile
K_PAD = 128    # >= C*KH*KW (= 27) : full-lane contraction width (unmasked vld)
N_PAD = 128    # >= OC (= 3)       : lane-dense output (unmasked vst)


def _identity_conv_kernel(p_ref, w_ref, b_ref, o_ref):
    # p_ref: [M_PAD, K_PAD]  zero-padded im2col patches (activation path)
    # w_ref: [K_PAD, N_PAD]  zero-padded flattened conv weight (precomputed)
    # b_ref: [1,     N_PAD]  zero-padded bias              (precomputed)
    # One MXU push; the bias add rides an idle VALU slot next to it.
    o_ref[...] = jnp.dot(p_ref[...], w_ref[...],
                         preferred_element_type=jnp.float32) + b_ref[...]


_conv_matmul = pl.pallas_call(
    _identity_conv_kernel,
    out_shape=jax.ShapeDtypeStruct((M_PAD, N_PAD), jnp.float32),
    in_specs=[
        pl.BlockSpec(memory_space=pltpu.MemorySpace.VMEM),
        pl.BlockSpec(memory_space=pltpu.MemorySpace.VMEM),
        pl.BlockSpec(memory_space=pltpu.MemorySpace.VMEM),
    ],
    out_specs=pl.BlockSpec(memory_space=pltpu.MemorySpace.VMEM),
)


def init_identity_conv(weight, bias):
    """Build a forward fn; weight/bias operands are padded ONCE here (call-invariant)."""
    OC, IC, KH, KW = weight.shape
    K = IC * KH * KW
    assert K <= K_PAD and OC <= N_PAD

    w_flat = jnp.asarray(weight, jnp.float32).reshape(OC, K).T            # [K, OC]
    w_pad = jax.device_put(jnp.pad(w_flat, ((0, K_PAD - K),
                                            (0, N_PAD - OC))))            # [K_PAD, N_PAD]
    b_pad = jax.device_put(jnp.pad(jnp.asarray(bias, jnp.float32).reshape(1, OC),
                                   ((0, 0), (0, N_PAD - OC))))            # [1, N_PAD]

    @jax.jit
    def forward(x):
        N, C, H, W = x.shape
        OH, OW = H - KH + 1, W - KW + 1
        M = N * OH * OW
        # TODO(synk): for M > 8 / OC > 128 add a tiled grid (M axis "parallel"
        # for v7x dual-TC, reduction axis last; 256-wide K/N tiles on v6e/v7x,
        # 128 on v5e; re-derive VMEM budget for v7x's 64 MiB).
        assert M <= M_PAD

        # im2col. For this module's fixed shape (H=W=KH=KW=3 -> OH=OW=1) the
        # patch matrix is just the flattened input: one cheap reshape.
        if OH == 1 and OW == 1:
            patches = x.reshape(M, K)
        else:
            # TODO(synk): generic im2col path is not exercised by this model;
            # validate its flattening order before relying on it.
            patches = jnp.stack(
                [x[:, :, i:i + OH, j:j + OW] for i in range(KH) for j in range(KW)],
                axis=2,
            ).transpose(0, 3, 4, 1, 2).reshape(M, K)

        p_pad = jnp.pad(patches.astype(jnp.float32),
                        ((0, M_PAD - M), (0, K_PAD - K)))

        out = _conv_matmul(p_pad, w_pad, b_pad)          # [M_PAD, N_PAD], lane-dense
        return out[:M, :OC].reshape(N, OH, OW, OC).transpose(0, 3, 1, 2)  # NCHW

    return forward


if __name__ == "__main__":
    key = jax.random.PRNGKey(0)
    kx, kw, kb = jax.random.split(key, 3)

    # INPUT_SHAPE = [1, 3, 3, 3]; Conv2d(3, 3, 3) -> weight [3, 3, 3, 3], bias [3]
    x = jax.random.normal(kx, (1, 3, 3, 3), dtype=jnp.float32)
    weight = jax.random.normal(kw, (3, 3, 3, 3), dtype=jnp.float32)
    bias = jax.random.normal(kb, (3,), dtype=jnp.float32)

    identity_conv_forward = init_identity_conv(weight, bias)
    y = jax.block_until_ready(identity_conv_forward(x))

    # Sanity check against XLA's conv (same NCHW/OIHW semantics as PyTorch).
    y_ref = lax.conv_general_dilated(
        x + 0.0, weight, window_strides=(1, 1), padding="VALID",
        dimension_numbers=("NCHW", "OIHW", "NCHW"),
    ) + bias.reshape(1, -1, 1, 1)
    np.testing.assert_allclose(np.asarray(y), np.asarray(y_ref),
                               rtol=1e-5, atol=1e-5)
    assert y.shape == (1, 3, 1, 1)

    print("KERNEL_OK")
</pallas_src>

<mosaic_0001>
module attributes {stable_mosaic.version = 11 : i64} {
  func.func @_identity_conv_kernel(%arg0: memref<8x128xf32, #tpu.memory_space<vmem>>, %arg1: memref<128x128xf32, #tpu.memory_space<vmem>>, %arg2: memref<1x128xf32, #tpu.memory_space<vmem>>, %arg3: memref<8x128xf32, #tpu.memory_space<vmem>>) attributes {dimension_semantics = [], scalar_prefetch = 0 : i64, scratch_operands = 0 : i64, tpu.core_type = #tpu.core_type<tc>} {
    %c0 = arith.constant 0 : index
    %c0_0 = arith.constant 0 : index
    %0 = vector.load %arg0[%c0, %c0_0] : memref<8x128xf32, #tpu.memory_space<vmem>>, vector<8x128xf32>
    %c0_1 = arith.constant 0 : index
    %c0_2 = arith.constant 0 : index
    %1 = vector.load %arg1[%c0_1, %c0_2] : memref<128x128xf32, #tpu.memory_space<vmem>>, vector<128x128xf32>
    %cst = arith.constant dense<0.000000e+00> : vector<8x128xf32>
    %2 = tpu.matmul %0, %1, %cst {dimension_numbers = #tpu.dot_dimension_numbers<[1], [0], [0], [1], [0, 0, 1, 1], [], []>} : vector<8x128xf32>, vector<128x128xf32>, vector<8x128xf32> -> vector<8x128xf32>
    %c0_3 = arith.constant 0 : index
    %c0_4 = arith.constant 0 : index
    %3 = vector.load %arg2[%c0_3, %c0_4] : memref<1x128xf32, #tpu.memory_space<vmem>>, vector<1x128xf32>
    %4 = vector.broadcast %3 : vector<1x128xf32> to vector<8x128xf32>
    %5 = arith.addf %2, %4 : vector<8x128xf32>
    %c0_5 = arith.constant 0 : index
    %c0_6 = arith.constant 0 : index
    %6 = vector.load %arg3[%c0_5, %c0_6] : memref<8x128xf32, #tpu.memory_space<vmem>>, vector<8x128xf32>
    tpu.vector_store %arg3[%c0_5, %c0_6], %5 {strides = array<i32>} : memref<8x128xf32, #tpu.memory_space<vmem>>, vector<8x128xf32>,
    return
  }
}

</mosaic_0001>

<llo_original>
// kernel: forward.1
$region0: #{forward.1}
  #allocation0 [shape = 'u32[]', space=smem, size = 0x4, offset = 0x4, fixed_abs, tag = 'smem constant byte address 0x4 - core index']
  #allocation1 [shape = 'u32[144,128]{1,0:T(1,128)}', space=vmem, size = 0x12000, scoped, tag = 'internal scratch']
  %s0 = inlined_call_operand.vmem [shape: f32[8,128], index: 0, kind: input, shape index: {}]
  %s1 = inlined_call_operand.hbm [shape: f32[128,128], index: 1, kind: input, shape index: {}]
  %s2 = inlined_call_operand.vmem [shape: f32[1,128], index: 2, kind: input, shape index: {}]
  %s3 = inlined_call_operand.vmem [shape: f32[8,128], index: 3, kind: output, shape index: {}]
  %s4 = sld [smem:[#allocation0]]
  $region26: #{forward.1} parent=0
    _
  %s6 = ssub.s32 1, %s4
  %s7 = scalar_select 0, %s6, %s4
  $region1: #{forward.1} parent=0
    #allocation2 [shape = 'u8[65536]{0}', space=vmem, size = 0x10000, scoped, tag = 'input window, operand 1, single buffered']
    #allocation3 [shape = 's32[1]{0}', space=sflag, size = 0x4, scoped, tag = 'scoped memory for forward.1']
    %8 = vsyncpa [#allocation3], 0
    // Predicated region
    $region2: #{forward.1} parent=1 // pred_check
      _
    $region3: #{forward.1} parent=1 // pred_check_branch
      %10 = sbr.rel (0) target = $region5
    $region4: #{forward.1} parent=1 // pred_region
      _
    $region5: #{forward.1} parent=1 // pred_fallthru
      _
    // Predicated region
    $region6: #{forward.1} parent=1 // pred_check
      _
    $region7: #{forward.1} parent=1 // pred_check_branch
      %12 = sbr.rel (0) target = $region9
    $region8: #{forward.1} parent=1 // pred_region
      %s14 = ssub.s32 2048, 2048
      %15 = vsyncadd [#allocation3], %s14
      %s16 = sshll.u32 [#allocation2], 4
      %s17 = int_to_ptr.vmem [resolvable:$true] %s16
      %22 = dma.hbm_to_vmem [thread:$0]  %s1, 2048, %s17, [#allocation3], 128, 128, 8
    $region9: #{forward.1} parent=1 // pred_fallthru
      _
    // Predicated region
    $region10: #{forward.1} parent=1 // pred_check
      _
    $region11: #{forward.1} parent=1 // pred_check_branch
      %24 = sbr.rel (0) target = $region13
    $region12: #{forward.1} parent=1 // pred_region
      _
    $region13: #{forward.1} parent=1 // pred_fallthru
      _
    // Predicated region
    $region14: #{forward.1} parent=1 // pred_check
      _
    $region15: #{forward.1} parent=1 // pred_check_branch
      %26 = sbr.rel (0) target = $region17
    $region16: #{forward.1} parent=1 // pred_region
      %27 = dma.done [#allocation3], 2048
    $region17: #{forward.1} parent=1 // pred_fallthru
      _
    %v28 = vld [vmem:[%s0] sm:$0xff]
    %v29 = vld [vmem:[#allocation2] sm:$0xff]
    %v30 = vld [vmem:[#allocation2 + $0x8] sm:$0xff]
    %v31 = vld [vmem:[#allocation2 + $0x10] sm:$0xff]
    %v32 = vld [vmem:[#allocation2 + $0x18] sm:$0xff]
    %v33 = vld [vmem:[#allocation2 + $0x20] sm:$0xff]
    %v34 = vld [vmem:[#allocation2 + $0x28] sm:$0xff]
    %v35 = vld [vmem:[#allocation2 + $0x30] sm:$0xff]
    %v36 = vld [vmem:[#allocation2 + $0x38] sm:$0xff]
    %v37 = vld [vmem:[#allocation2 + $0x40] sm:$0xff]
    %v38 = vld [vmem:[#allocation2 + $0x48] sm:$0xff]
    %v39 = vld [vmem:[#allocation2 + $0x50] sm:$0xff]
    %v40 = vld [vmem:[#allocation2 + $0x58] sm:$0xff]
    %v41 = vld [vmem:[#allocation2 + $0x60] sm:$0xff]
    %v42 = vld [vmem:[#allocation2 + $0x68] sm:$0xff]
    %v43 = vld [vmem:[#allocation2 + $0x70] sm:$0xff]
    %v44 = vld [vmem:[#allocation2 + $0x78] sm:$0xff]
    %v45 = vld [vmem:[%s2] sm:$0x1]
    %v47 = vlaneseq
    %v48 = vshrl.u32 %v47, 7
    %v49 = vsub.s32 0, %v48
    %v50 = vrot.slane %v45, %v49
    %52 = vmatprep.subr.mxu0 0.0
    %53 = vmatpush1.msra.mxu0 %v29
    %54 = vmatprep.subr.mxu0 0.0
    %55 = vmatpush1.msra.mxu0 %v30
    %56 = vmatprep.subr.mxu0 0.0
    %57 = vmatpush1.msra.mxu0 %v31
    %58 = vmatprep.subr.mxu0 0.0
    %59 = vmatpush1.msra.mxu0 %v32
    %60 = vmatprep.subr.mxu0 0.0
    %61 = vmatpush1.msra.mxu0 %v33
    %62 = vmatprep.subr.mxu0 0.0
    %63 = vmatpush1.msra.mxu0 %v34
    %64 = vmatprep.subr.mxu0 0.0
    %65 = vmatpush1.msra.mxu0 %v35
    %66 = vmatprep.subr.mxu0 0.0
    %67 = vmatpush1.msra.mxu0 %v36
    %68 = vmatprep.subr.mxu0 0.0
    %69 = vmatpush1.msra.mxu0 %v37
    %70 = vmatprep.subr.mxu0 0.0
    %71 = vmatpush1.msra.mxu0 %v38
    %72 = vmatprep.subr.mxu0 0.0
    %73 = vmatpush1.msra.mxu0 %v39
    %74 = vmatprep.subr.mxu0 0.0
    %75 = vmatpush1.msra.mxu0 %v40
    %76 = vmatprep.subr.mxu0 0.0
    %77 = vmatpush1.msra.mxu0 %v41
    %78 = vmatprep.subr.mxu0 0.0
    %79 = vmatpush1.msra.mxu0 %v42
    %80 = vmatprep.subr.mxu0 0.0
    %81 = vmatpush1.msra.mxu0 %v43
    %82 = vmatprep.subr.mxu0 0.0
    %83 = vmatpush1.msra.mxu0 %v44
    %84 = vmatprep.subr.mxu0 0.0
    %85 = vmatpush1.msra.mxu0 0.0
    %86 = vmatprep.subr.mxu0 0.0
    %87 = vmatpush1.msra.mxu0 0.0
    %88 = vmatprep.subr.mxu0 0.0
    %89 = vmatpush1.msra.mxu0 0.0
    %90 = vmatprep.subr.mxu0 0.0
    %91 = vmatpush1.msra.mxu0 0.0
    %92 = vmatprep.subr.mxu0 0.0
    %93 = vmatpush1.msra.mxu0 0.0
    %94 = vmatprep.subr.mxu0 0.0
    %95 = vmatpush1.msra.mxu0 0.0
    %96 = vmatprep.subr.mxu0 0.0
    %97 = vmatpush1.msra.mxu0 0.0
    %98 = vmatprep.subr.mxu0 0.0
    %99 = vmatpush1.msra.mxu0 0.0
    %100 = vmatprep.subr.mxu0 0.0
    %101 = vmatpush1.msra.mxu0 0.0
    %102 = vmatprep.subr.mxu0 0.0
    %103 = vmatpush1.msra.mxu0 0.0
    %104 = vmatprep.subr.mxu0 0.0
    %105 = vmatpush1.msra.mxu0 0.0
    %106 = vmatprep.subr.mxu0 0.0
    %107 = vmatpush1.msra.mxu0 0.0
    %108 = vmatprep.subr.mxu0 0.0
    %109 = vmatpush1.msra.mxu0 0.0
    %110 = vmatprep.subr.mxu0 0.0
    %111 = vmatpush1.msra.mxu0 0.0
    %112 = vmatprep.subr.mxu0 0.0
    %113 = vmatpush1.msra.mxu0 0.0
    %114 = vmatprep.subr.mxu0 0.0
    %115 = vmatpush1.msra.mxu0 0.0
    %116 = vmatprep.mubr.f32.mxu0 0.0
    %117 = vmatmul.mubr.f32.gmra.mrb[0].mxu0 %v28
    %v118 = vpop.f32.mrb[0].mxu0
    %v119 = vadd.f32 %v50, %v118
    %v120 = vpop.f32.mrb[0].mxu0
    %121 = vdwg.mxu0
    %122 = vst [vmem:[%s3] sm:$0xff] %v119
    // Predicated region
    $region18: #{forward.1} parent=1 // pred_check
      _
    $region19: #{forward.1} parent=1 // pred_check_branch
      %124 = sbr.rel (0) target = $region21
    $region20: #{forward.1} parent=1 // pred_region
      _
    $region21: #{forward.1} parent=1 // pred_fallthru
      _
    // Predicated region
    $region22: #{forward.1} parent=1 // pred_check
      _
    $region23: #{forward.1} parent=1 // pred_check_branch
      %126 = sbr.rel (0) target = $region25
    $region24: #{forward.1} parent=1 // pred_region
      _
    $region25: #{forward.1} parent=1 // pred_fallthru
      _
    %127 = vsyncpa [#allocation3], 1

</llo_original>
